<compile_context>
chip_gen: v7x
topology: tpu7x:2x2x1
jax: 0.10.0
libtpu: 0.0.40
codegen_flags: <defaults>
</compile_context>

<pallas_src>
import functools

import jax
import jax.numpy as jnp
from jax import lax
from jax.experimental import pallas as pl
from jax.experimental.pallas import tpu as pltpu

LN_EPS = 1e-5        # PyTorch nn.LayerNorm default
LANE = 128
OUT_LANES = 128      # lane-dense output slab; q1 in lane 0, q2 in lane 1


def _rup(n, m):
    return ((n + m - 1) // m) * m


def _pad_to(x, shape):
    pads = [(0, t - s) for s, t in zip(x.shape, shape)]
    return jnp.pad(x, pads)


# --------------------------------------------------------------------------
# Kernel
# --------------------------------------------------------------------------
def _critic_kernel(
    obs_ref, act_ref,
    wt_ref,     # (repr_dim, F_pad)      bf16   trunk Linear
    w1h_ref,    # (F_pad,   2*H_pad)     bf16   fused first layer (h part)
    w1a_ref,    # (A_pad,   2*H_pad)     bf16   fused first layer (action part)
    w2_ref,     # (2*H_pad, 2*H_pad)     bf16   block-diagonal fused second layer
    w3_ref,     # (2*H_pad, OUT_LANES)   bf16   fused finals (cols 0/1 nonzero)
    bias_ref,   # (8, W)                 f32    packed bias/gamma/beta slab
    out_ref,    # (tb, OUT_LANES)        f32
    *, feature_dim, f_pad, h2_pad, out_lanes,
):
    f32 = jnp.float32
    bf16 = jnp.bfloat16

    obs = obs_ref[...].astype(bf16)
    act = act_ref[...].astype(bf16)

    trunk_b = bias_ref[0:1, :f_pad]
    gamma = bias_ref[1:2, :f_pad]
    beta = bias_ref[2:3, :f_pad]
    b1 = bias_ref[3:4, :h2_pad]
    b2 = bias_ref[4:5, :h2_pad]
    b3 = bias_ref[5:6, :out_lanes]

    # ---- trunk Linear (bf16 MXU, f32 accumulation) ----
    h = jnp.dot(obs, wt_ref[...], preferred_element_type=f32) + trunk_b

    # ---- LayerNorm (f32 stats).  Padded lanes of h are exactly zero (weights
    # and bias are zero-padded), so E[h] and E[h^2] over the true feature_dim
    # are obtained by summing over all f_pad lanes — no mask pass needed.
    inv_f = 1.0 / float(feature_dim)
    mean = jnp.sum(h, axis=-1, keepdims=True) * inv_f
    var = jnp.sum(h * h, axis=-1, keepdims=True) * inv_f - mean * mean
    hn = (h - mean) * lax.rsqrt(var + LN_EPS)
    h = jnp.tanh(hn * gamma + beta)          # gamma/beta padded 0 -> lanes stay 0

    # ---- fused first layer of both Q heads + action contribution (all MXU) ----
    z = (jnp.dot(h.astype(bf16), w1h_ref[...], preferred_element_type=f32)
         + jnp.dot(act, w1a_ref[...], preferred_element_type=f32)
         + b1)
    z = jnp.maximum(z, 0.0)

    # ---- fused (block-diagonal) second layer of both heads ----
    y = jnp.maximum(
        jnp.dot(z.astype(bf16), w2_ref[...], preferred_element_type=f32) + b2,
        0.0)

    # ---- fused final N=1 layers + output assembly on the MXU:
    # w3 columns 0/1 carry q1/q2 weights, everything else is zero, so the
    # result is already the lane-dense (tb, OUT_LANES) output slab.
    out_ref[...] = jnp.dot(y.astype(bf16), w3_ref[...],
                           preferred_element_type=f32) + b3


# --------------------------------------------------------------------------
# Weight packing (done ONCE, not per forward call)
# --------------------------------------------------------------------------
def pack_params(params, *, weight_dtype=jnp.bfloat16):
    p = params
    repr_dim, feature_dim = p["trunk_w"].shape
    hidden_dim = p["q1_w2"].shape[0]
    action_dim = p["q1_w1"].shape[0] - feature_dim
    assert action_dim <= LANE, "action_dim must fit in one 128-lane tile"

    F_pad = _rup(feature_dim, LANE)
    H_pad = _rup(hidden_dim, LANE)
    H2 = 2 * H_pad
    A_pad = LANE
    W = max(F_pad, H2, OUT_LANES)
    wd = weight_dtype

    # trunk Linear: K (= repr_dim) left unpadded; only the lane dim is padded.
    trunk_w = _pad_to(p["trunk_w"], (repr_dim, F_pad)).astype(wd)

    # fused first layer of both heads: split torch's [F+A, H] into h/action parts.
    q1h, q1a = p["q1_w1"][:feature_dim], p["q1_w1"][feature_dim:]
    q2h, q2a = p["q2_w1"][:feature_dim], p["q2_w1"][feature_dim:]
    w1h = jnp.concatenate([_pad_to(q1h, (F_pad, H_pad)),
                           _pad_to(q2h, (F_pad, H_pad))], axis=1).astype(wd)
    w1a = jnp.concatenate([_pad_to(q1a, (A_pad, H_pad)),
                           _pad_to(q2a, (A_pad, H_pad))], axis=1).astype(wd)

    # block-diagonal fused second layer.
    w2 = jnp.zeros((H2, H2), jnp.float32)
    w2 = w2.at[:hidden_dim, :hidden_dim].set(p["q1_w2"])
    w2 = w2.at[H_pad:H_pad + hidden_dim, H_pad:H_pad + hidden_dim].set(p["q2_w2"])
    w2 = w2.astype(wd)

    # fused final layers -> lane 0 (q1) and lane 1 (q2) of the output slab.
    w3 = jnp.zeros((H2, OUT_LANES), jnp.float32)
    w3 = w3.at[:hidden_dim, 0].set(p["q1_w3"].reshape(-1))
    w3 = w3.at[H_pad:H_pad + hidden_dim, 1].set(p["q2_w3"].reshape(-1))
    w3 = w3.astype(wd)

    # one (8, W) f32 slab for all bias / gamma / beta rows (single DMA).
    bias = jnp.zeros((8, W), jnp.float32)
    bias = bias.at[0, :feature_dim].set(p["trunk_b"])
    bias = bias.at[1, :feature_dim].set(p["ln_gamma"])
    bias = bias.at[2, :feature_dim].set(p["ln_beta"])
    bias = bias.at[3, :hidden_dim].set(p["q1_b1"])
    bias = bias.at[3, H_pad:H_pad + hidden_dim].set(p["q2_b1"])
    bias = bias.at[4, :hidden_dim].set(p["q1_b2"])
    bias = bias.at[4, H_pad:H_pad + hidden_dim].set(p["q2_b2"])
    bias = bias.at[5, 0].set(p["q1_b3"].reshape(()))
    bias = bias.at[5, 1].set(p["q2_b3"].reshape(()))

    weights = dict(trunk_w=trunk_w, w1h=w1h, w1a=w1a, w2=w2, w3=w3, bias=bias)
    cfg = dict(repr_dim=repr_dim, feature_dim=feature_dim, hidden_dim=hidden_dim,
               action_dim=action_dim, F_pad=F_pad, H_pad=H_pad, H2=H2,
               A_pad=A_pad, W=W)
    return weights, cfg


def _choose_tb(B, block_b):
    """Batch tile.  Use 256 for block_b on v6e/v7x with large batches."""
    block_b = max(8, _rup(block_b, 8))
    B8 = _rup(B, 8)
    if B8 > block_b:
        return block_b
    if B8 >= 128:
        # Split a would-be single grid step in two so v7x's 2 TensorCores
        # (sharded over the "parallel" grid axis) both get work.
        return _rup((B8 + 1) // 2, 8)
    return B8


def _critic_call(obs, action, weights, *, cfg, block_b):
    B, repr_dim = obs.shape
    assert repr_dim == cfg["repr_dim"]
    a_pad = cfg["A_pad"]

    tb = _choose_tb(B, block_b)
    B_pad = _rup(B, tb)
    grid = (B_pad // tb,)

    # obs: no repr_dim padding (block last dim == full array dim is legal);
    # batch padded only when B is not a tile multiple.
    if B_pad != B:
        obs = jnp.pad(obs, ((0, B_pad - B), (0, 0)))
    act = jnp.pad(action, ((0, B_pad - B), (0, a_pad - cfg["action_dim"])))
    act = act.astype(jnp.float32)

    w_list = [weights[k] for k in ("trunk_w", "w1h", "w1a", "w2", "w3", "bias")]

    def wspec(arr):
        # grid-invariant weights: single-buffered, resident for the whole call
        return pl.BlockSpec(arr.shape, lambda i: (0,) * arr.ndim,
                            pipeline_mode=pl.Buffered(1))

    in_specs = ([pl.BlockSpec((tb, repr_dim), lambda i: (i, 0)),
                 pl.BlockSpec((tb, a_pad), lambda i: (i, 0))]
                + [wspec(w) for w in w_list])
    out_specs = pl.BlockSpec((tb, OUT_LANES), lambda i: (i, 0))

    kernel = functools.partial(
        _critic_kernel,
        feature_dim=cfg["feature_dim"], f_pad=cfg["F_pad"],
        h2_pad=cfg["H2"], out_lanes=OUT_LANES)

    out = pl.pallas_call(
        kernel,
        out_shape=jax.ShapeDtypeStruct((B_pad, OUT_LANES), jnp.float32),
        grid=grid,
        in_specs=in_specs,
        out_specs=out_specs,
        compiler_params=pltpu.CompilerParams(
            dimension_semantics=("parallel",),   # shard batch tiles across TCs
            vmem_limit_bytes=48 * 1024 * 1024,   # > v5e's ~16 MiB scoped default
        ),
    )(obs, act, *w_list)

    return out[:B, 0:1], out[:B, 1:2]


def make_critic_forward(params, *, block_b=128, weight_dtype=jnp.bfloat16):
    """Pack weights once and return a jitted forward(obs, action) -> (q1, q2)."""
    weights, cfg = pack_params(params, weight_dtype=weight_dtype)
    fn = jax.jit(functools.partial(_critic_call, cfg=cfg, block_b=block_b))

    def forward(obs, action):
        return fn(obs, action, weights)

    return forward


def critic_forward(obs, action, params, *, block_b=128, weight_dtype=jnp.bfloat16):
    """One-shot convenience wrapper (re-packs weights every call)."""
    weights, cfg = pack_params(params, weight_dtype=weight_dtype)
    return _critic_call(obs, action, weights, cfg=cfg, block_b=block_b)


# --------------------------------------------------------------------------
# Synthetic parameters + pure-JAX reference
# --------------------------------------------------------------------------
def init_params(key, repr_dim, action_dim, feature_dim, hidden_dim):
    """Deterministic synthetic weights, stored as [in_features, out_features]."""
    ks = jax.random.split(key, 8)

    def lin(k, fin, fout):
        kw, kb = jax.random.split(k)
        w = jax.random.normal(kw, (fin, fout), jnp.float32) / jnp.sqrt(fin)
        b = 0.1 * jax.random.normal(kb, (fout,), jnp.float32)
        return w, b

    trunk_w, trunk_b = lin(ks[0], repr_dim, feature_dim)
    ln_gamma = 1.0 + 0.1 * jax.random.normal(ks[1], (feature_dim,), jnp.float32)
    ln_beta = 0.1 * jax.random.normal(ks[2], (feature_dim,), jnp.float32)

    q1_w1, q1_b1 = lin(ks[3], feature_dim + action_dim, hidden_dim)
    q1_w2, q1_b2 = lin(ks[4], hidden_dim, hidden_dim)
    q1_w3, q1_b3 = lin(ks[5], hidden_dim, 1)

    q2_w1, q2_b1 = lin(ks[6], feature_dim + action_dim, hidden_dim)
    q2_w2, q2_b2 = lin(ks[7], hidden_dim, hidden_dim)
    q2_w3, q2_b3 = lin(jax.random.fold_in(ks[7], 1), hidden_dim, 1)

    return dict(
        trunk_w=trunk_w, trunk_b=trunk_b, ln_gamma=ln_gamma, ln_beta=ln_beta,
        q1_w1=q1_w1, q1_b1=q1_b1, q1_w2=q1_w2, q1_b2=q1_b2, q1_w3=q1_w3, q1_b3=q1_b3,
        q2_w1=q2_w1, q2_b1=q2_b1, q2_w2=q2_w2, q2_b2=q2_b2, q2_w3=q2_w3, q2_b3=q2_b3,
    )


def critic_forward_ref(obs, action, params):
    """Pure-JAX f32 reference matching the PyTorch module."""
    p = params
    h = obs @ p["trunk_w"] + p["trunk_b"]
    mean = jnp.mean(h, axis=-1, keepdims=True)
    var = jnp.mean((h - mean) ** 2, axis=-1, keepdims=True)
    h = (h - mean) / jnp.sqrt(var + LN_EPS)
    h = jnp.tanh(h * p["ln_gamma"] + p["ln_beta"])
    ha = jnp.concatenate([h, action], axis=-1)

    def head(q):
        z = jnp.maximum(ha @ p[q + "_w1"] + p[q + "_b1"], 0.0)
        z = jnp.maximum(z @ p[q + "_w2"] + p[q + "_b2"], 0.0)
        return z @ p[q + "_w3"] + p[q + "_b3"]

    return head("q1"), head("q2")


if __name__ == "__main__":
    # Small, intentionally unaligned shapes (wrapper pads lane dims to 128).
    B, repr_dim, feature_dim, hidden_dim, action_dim = 64, 84, 50, 96, 6

    key = jax.random.PRNGKey(0)
    k_obs, k_act, k_par = jax.random.split(key, 3)
    obs = jax.random.normal(k_obs, (B, repr_dim), jnp.float32)
    action = jax.random.uniform(k_act, (B, action_dim), jnp.float32,
                                minval=-1.0, maxval=1.0)
    params = init_params(k_par, repr_dim, action_dim, feature_dim, hidden_dim)

    forward = make_critic_forward(params)     # pack weights once + jit wrapper
    q1, q2 = forward(obs, action)
    q1 = jax.block_until_ready(q1)
    q2 = jax.block_until_ready(q2)

    # sanity check against pure-f32 reference (bf16 MXU feeds -> loose tol)
    q1_ref, q2_ref = critic_forward_ref(obs, action, params)
    assert q1.shape == (B, 1) and q2.shape == (B, 1)
    assert jnp.allclose(q1, q1_ref, atol=1e-1, rtol=1e-1), \
        float(jnp.max(jnp.abs(q1 - q1_ref)))
    assert jnp.allclose(q2, q2_ref, atol=1e-1, rtol=1e-1), \
        float(jnp.max(jnp.abs(q2 - q2_ref)))

    print("KERNEL_OK")
</pallas_src>

<mosaic_0001>
module attributes {stable_mosaic.version = 11 : i64} {
  func.func @_critic_kernel(%arg0: i32, %arg1: memref<64x84xf32, #tpu.memory_space<vmem>>, %arg2: memref<64x128xf32, #tpu.memory_space<vmem>>, %arg3: memref<84x128xbf16, #tpu.memory_space<vmem>>, %arg4: memref<128x256xbf16, #tpu.memory_space<vmem>>, %arg5: memref<128x256xbf16, #tpu.memory_space<vmem>>, %arg6: memref<256x256xbf16, #tpu.memory_space<vmem>>, %arg7: memref<256x128xbf16, #tpu.memory_space<vmem>>, %arg8: memref<8x256xf32, #tpu.memory_space<vmem>>, %arg9: memref<64x128xf32, #tpu.memory_space<vmem>>) attributes {dimension_semantics = [#tpu.dimension_semantics<parallel>], iteration_bounds = array<i64: 1>, scalar_prefetch = 0 : i64, scratch_operands = 0 : i64, tpu.core_type = #tpu.core_type<tc>, window_params = [{transform_indices = @transform_0, window_bounds = array<i64: 64, 84>}, {transform_indices = @transform_1, window_bounds = array<i64: 64, 128>}, {pipeline_mode = #tpu.pipeline_mode<synchronous>, transform_indices = @transform_2, window_bounds = array<i64: 84, 128>}, {pipeline_mode = #tpu.pipeline_mode<synchronous>, transform_indices = @transform_3, window_bounds = array<i64: 128, 256>}, {pipeline_mode = #tpu.pipeline_mode<synchronous>, transform_indices = @transform_4, window_bounds = array<i64: 128, 256>}, {pipeline_mode = #tpu.pipeline_mode<synchronous>, transform_indices = @transform_5, window_bounds = array<i64: 256, 256>}, {pipeline_mode = #tpu.pipeline_mode<synchronous>, transform_indices = @transform_6, window_bounds = array<i64: 256, 128>}, {pipeline_mode = #tpu.pipeline_mode<synchronous>, transform_indices = @transform_7, window_bounds = array<i64: 8, 256>}, {transform_indices = @transform_8, window_bounds = array<i64: 64, 128>}]} {
    %c0 = arith.constant 0 : index
    %c0_0 = arith.constant 0 : index
    %0 = vector.load %arg1[%c0, %c0_0] : memref<64x84xf32, #tpu.memory_space<vmem>>, vector<64x84xf32>
    %1 = arith.truncf %0 : vector<64x84xf32> to vector<64x84xbf16>
    %c0_1 = arith.constant 0 : index
    %c0_2 = arith.constant 0 : index
    %2 = vector.load %arg2[%c0_1, %c0_2] : memref<64x128xf32, #tpu.memory_space<vmem>>, vector<64x128xf32>
    %3 = arith.truncf %2 : vector<64x128xf32> to vector<64x128xbf16>
    %c0_3 = arith.constant 0 : index
    %c0_4 = arith.constant 0 : index
    %4 = vector.load %arg8[%c0_3, %c0_4] : memref<8x256xf32, #tpu.memory_space<vmem>>, vector<1x128xf32>
    %c1 = arith.constant 1 : index
    %c0_5 = arith.constant 0 : index
    %5 = vector.load %arg8[%c1, %c0_5] : memref<8x256xf32, #tpu.memory_space<vmem>>, vector<1x128xf32>
    %c2 = arith.constant 2 : index
    %c0_6 = arith.constant 0 : index
    %6 = vector.load %arg8[%c2, %c0_6] : memref<8x256xf32, #tpu.memory_space<vmem>>, vector<1x128xf32>
    %c3 = arith.constant 3 : index
    %c0_7 = arith.constant 0 : index
    %7 = vector.load %arg8[%c3, %c0_7] : memref<8x256xf32, #tpu.memory_space<vmem>>, vector<1x256xf32>
    %c4 = arith.constant 4 : index
    %c0_8 = arith.constant 0 : index
    %8 = vector.load %arg8[%c4, %c0_8] : memref<8x256xf32, #tpu.memory_space<vmem>>, vector<1x256xf32>
    %c5 = arith.constant 5 : index
    %c0_9 = arith.constant 0 : index
    %9 = vector.load %arg8[%c5, %c0_9] : memref<8x256xf32, #tpu.memory_space<vmem>>, vector<1x128xf32>
    %c0_10 = arith.constant 0 : index
    %c0_11 = arith.constant 0 : index
    %10 = vector.load %arg3[%c0_10, %c0_11] : memref<84x128xbf16, #tpu.memory_space<vmem>>, vector<84x128xbf16>
    %cst = arith.constant dense<0.000000e+00> : vector<64x128xf32>
    %11 = tpu.matmul %1, %10, %cst {dimension_numbers = #tpu.dot_dimension_numbers<[1], [0], [0], [1], [0, 0, 1, 1], [], []>} : vector<64x84xbf16>, vector<84x128xbf16>, vector<64x128xf32> -> vector<64x128xf32>
    %12 = vector.broadcast %4 : vector<1x128xf32> to vector<64x128xf32>
    %13 = arith.addf %11, %12 : vector<64x128xf32>
    %cst_12 = arith.constant dense<0.000000e+00> : vector<64xf32>
    %14 = vector.multi_reduction <add>, %13, %cst_12 [1] : vector<64x128xf32> to vector<64xf32>
    %15 = vector.shape_cast %14 : vector<64xf32> to vector<64x1xf32>
    %cst_13 = arith.constant 2.000000e-02 : f32
    %16 = vector.broadcast %cst_13 : f32 to vector<64x1xf32>
    %17 = arith.mulf %15, %16 : vector<64x1xf32>
    %18 = arith.mulf %13, %13 : vector<64x128xf32>
    %cst_14 = arith.constant dense<0.000000e+00> : vector<64xf32>
    %19 = vector.multi_reduction <add>, %18, %cst_14 [1] : vector<64x128xf32> to vector<64xf32>
    %20 = vector.shape_cast %19 : vector<64xf32> to vector<64x1xf32>
    %cst_15 = arith.constant 2.000000e-02 : f32
    %21 = vector.broadcast %cst_15 : f32 to vector<64x1xf32>
    %22 = arith.mulf %20, %21 : vector<64x1xf32>
    %23 = arith.mulf %17, %17 : vector<64x1xf32>
    %24 = arith.subf %22, %23 : vector<64x1xf32>
    %25 = vector.broadcast %17 : vector<64x1xf32> to vector<64x128xf32>
    %26 = arith.subf %13, %25 : vector<64x128xf32>
    %cst_16 = arith.constant 9.99999974E-6 : f32
    %27 = vector.broadcast %cst_16 : f32 to vector<64x1xf32>
    %28 = arith.addf %24, %27 : vector<64x1xf32>
    %29 = math.rsqrt %28 : vector<64x1xf32>
    %30 = vector.broadcast %29 : vector<64x1xf32> to vector<64x128xf32>
    %31 = arith.mulf %26, %30 : vector<64x128xf32>
    %32 = vector.broadcast %5 : vector<1x128xf32> to vector<64x128xf32>
    %33 = arith.mulf %31, %32 : vector<64x128xf32>
    %34 = vector.broadcast %6 : vector<1x128xf32> to vector<64x128xf32>
    %35 = arith.addf %33, %34 : vector<64x128xf32>
    %36 = math.tanh %35 : vector<64x128xf32>
    %37 = arith.truncf %36 : vector<64x128xf32> to vector<64x128xbf16>
    %c0_17 = arith.constant 0 : index
    %c0_18 = arith.constant 0 : index
    %38 = vector.load %arg4[%c0_17, %c0_18] : memref<128x256xbf16, #tpu.memory_space<vmem>>, vector<128x256xbf16>
    %cst_19 = arith.constant dense<0.000000e+00> : vector<64x256xf32>
    %39 = tpu.matmul %37, %38, %cst_19 {dimension_numbers = #tpu.dot_dimension_numbers<[1], [0], [0], [1], [0, 0, 1, 1], [], []>} : vector<64x128xbf16>, vector<128x256xbf16>, vector<64x256xf32> -> vector<64x256xf32>
    %c0_20 = arith.constant 0 : index
    %c0_21 = arith.constant 0 : index
    %40 = vector.load %arg5[%c0_20, %c0_21] : memref<128x256xbf16, #tpu.memory_space<vmem>>, vector<128x256xbf16>
    %cst_22 = arith.constant dense<0.000000e+00> : vector<64x256xf32>
    %41 = tpu.matmul %3, %40, %cst_22 {dimension_numbers = #tpu.dot_dimension_numbers<[1], [0], [0], [1], [0, 0, 1, 1], [], []>} : vector<64x128xbf16>, vector<128x256xbf16>, vector<64x256xf32> -> vector<64x256xf32>
    %42 = arith.addf %39, %41 : vector<64x256xf32>
    %43 = vector.broadcast %7 : vector<1x256xf32> to vector<64x256xf32>
    %44 = arith.addf %42, %43 : vector<64x256xf32>
    %cst_23 = arith.constant 0.000000e+00 : f32
    %45 = vector.broadcast %cst_23 : f32 to vector<64x256xf32>
    %46 = arith.maximumf %44, %45 : vector<64x256xf32>
    %47 = arith.truncf %46 : vector<64x256xf32> to vector<64x256xbf16>
    %c0_24 = arith.constant 0 : index
    %c0_25 = arith.constant 0 : index
    %48 = vector.load %arg6[%c0_24, %c0_25] : memref<256x256xbf16, #tpu.memory_space<vmem>>, vector<256x256xbf16>
    %cst_26 = arith.constant dense<0.000000e+00> : vector<64x256xf32>
    %49 = tpu.matmul %47, %48, %cst_26 {dimension_numbers = #tpu.dot_dimension_numbers<[1], [0], [0], [1], [0, 0, 1, 1], [], []>} : vector<64x256xbf16>, vector<256x256xbf16>, vector<64x256xf32> -> vector<64x256xf32>
    %50 = vector.broadcast %8 : vector<1x256xf32> to vector<64x256xf32>
    %51 = arith.addf %49, %50 : vector<64x256xf32>
    %cst_27 = arith.constant 0.000000e+00 : f32
    %52 = vector.broadcast %cst_27 : f32 to vector<64x256xf32>
    %53 = arith.maximumf %51, %52 : vector<64x256xf32>
    %54 = arith.truncf %53 : vector<64x256xf32> to vector<64x256xbf16>
    %c0_28 = arith.constant 0 : index
    %c0_29 = arith.constant 0 : index
    %55 = vector.load %arg7[%c0_28, %c0_29] : memref<256x128xbf16, #tpu.memory_space<vmem>>, vector<256x128xbf16>
    %cst_30 = arith.constant dense<0.000000e+00> : vector<64x128xf32>
    %56 = tpu.matmul %54, %55, %cst_30 {dimension_numbers = #tpu.dot_dimension_numbers<[1], [0], [0], [1], [0, 0, 1, 1], [], []>} : vector<64x256xbf16>, vector<256x128xbf16>, vector<64x128xf32> -> vector<64x128xf32>
    %57 = vector.broadcast %9 : vector<1x128xf32> to vector<64x128xf32>
    %58 = arith.addf %56, %57 : vector<64x128xf32>
    %c0_31 = arith.constant 0 : index
    %c0_32 = arith.constant 0 : index
    %59 = vector.load %arg9[%c0_31, %c0_32] : memref<64x128xf32, #tpu.memory_space<vmem>>, vector<64x128xf32>
    tpu.vector_store %arg9[%c0_31, %c0_32], %58 {strides = array<i32>} : memref<64x128xf32, #tpu.memory_space<vmem>>, vector<64x128xf32>,
    return
  }
  func.func @transform_0(%arg0: i32) -> (i32, i32) {
    %c0_i32 = arith.constant 0 : i32
    %c0_i32_0 = arith.constant 0 : i32
    return %arg0, %c0_i32 : i32, i32
  }
  func.func @transform_1(%arg0: i32) -> (i32, i32) {
    %c0_i32 = arith.constant 0 : i32
    %c0_i32_0 = arith.constant 0 : i32
    return %arg0, %c0_i32 : i32, i32
  }
  func.func @transform_2(%arg0: i32) -> (i32, i32) {
    %c0_i32 = arith.constant 0 : i32
    %c0_i32_0 = arith.constant 0 : i32
    %c0_i32_1 = arith.constant 0 : i32
    return %c0_i32, %c0_i32_0 : i32, i32
  }
  func.func @transform_3(%arg0: i32) -> (i32, i32) {
    %c0_i32 = arith.constant 0 : i32
    %c0_i32_0 = arith.constant 0 : i32
    %c0_i32_1 = arith.constant 0 : i32
    return %c0_i32, %c0_i32_0 : i32, i32
  }
  func.func @transform_4(%arg0: i32) -> (i32, i32) {
    %c0_i32 = arith.constant 0 : i32
    %c0_i32_0 = arith.constant 0 : i32
    %c0_i32_1 = arith.constant 0 : i32
    return %c0_i32, %c0_i32_0 : i32, i32
  }
  func.func @transform_5(%arg0: i32) -> (i32, i32) {
    %c0_i32 = arith.constant 0 : i32
    %c0_i32_0 = arith.constant 0 : i32
    %c0_i32_1 = arith.constant 0 : i32
    return %c0_i32, %c0_i32_0 : i32, i32
  }
  func.func @transform_6(%arg0: i32) -> (i32, i32) {
    %c0_i32 = arith.constant 0 : i32
    %c0_i32_0 = arith.constant 0 : i32
    %c0_i32_1 = arith.constant 0 : i32
    return %c0_i32, %c0_i32_0 : i32, i32
  }
  func.func @transform_7(%arg0: i32) -> (i32, i32) {
    %c0_i32 = arith.constant 0 : i32
    %c0_i32_0 = arith.constant 0 : i32
    %c0_i32_1 = arith.constant 0 : i32
    return %c0_i32, %c0_i32_0 : i32, i32
  }
  func.func @transform_8(%arg0: i32) -> (i32, i32) {
    %c0_i32 = arith.constant 0 : i32
    %c0_i32_0 = arith.constant 0 : i32
    return %arg0, %c0_i32 : i32, i32
  }
}

</mosaic_0001>

<llo_original>
// kernel: _critic_call.1
$region0: #{_critic_call.1}
  #allocation0 [shape = 'u32[]', space=smem, size = 0x4, offset = 0x4, fixed_abs, tag = 'smem constant byte address 0x4 - core index']
  #allocation1 [shape = 'u32[144,128]{1,0:T(1,128)}', space=vmem, size = 0x12000, scoped, tag = 'internal scratch']
  %s0 = inlined_call_operand.vmem [shape: f32[64,84], index: 0, kind: input, shape index: {}]
  %s1 = inlined_call_operand.vmem [shape: f32[64,128], index: 1, kind: input, shape index: {}]
  %s2 = inlined_call_operand.hbm [shape: bf16[84,128], index: 2, kind: input, shape index: {}]
  %s3 = inlined_call_operand.vmem [shape: bf16[128,256], index: 3, kind: input, shape index: {}]
  %s4 = inlined_call_operand.hbm [shape: bf16[128,256], index: 4, kind: input, shape index: {}]
  %s5 = inlined_call_operand.hbm [shape: bf16[256,256], index: 5, kind: input, shape index: {}]
  %s6 = inlined_call_operand.hbm [shape: bf16[256,128], index: 6, kind: input, shape index: {}]
  %s7 = inlined_call_operand.vmem [shape: f32[8,256], index: 7, kind: input, shape index: {}]
  %s8 = inlined_call_operand.vmem [shape: f32[64,128], index: 8, kind: output, shape index: {}]
  %s9 = sld [smem:[#allocation0]]
  $region58: #{_critic_call.1} parent=0
    _
  %s11 = ssub.s32 1, %s9
  %s12 = scalar_select 0, %s11, %s9
  $region1: #{_critic_call.1} parent=0
    #allocation2 [shape = 'u8[22528]{0}', space=vmem, size = 0x5800, scoped, tag = 'input window, operand 2, single buffered']
    #allocation3 [shape = 's32[1]{0}', space=sflag, size = 0x4, scoped, tag = 'scoped memory for _critic_call.1']
    #allocation4 [shape = 'u8[65536]{0}', space=vmem, size = 0x10000, scoped, tag = 'input window, operand 4, single buffered']
    #allocation5 [shape = 's32[1]{0}', space=sflag, size = 0x4, scoped, tag = 'scoped memory for _critic_call.1']
    #allocation6 [shape = 'u8[131072]{0}', space=vmem, size = 0x20000, scoped, tag = 'input window, operand 5, single buffered']
    #allocation7 [shape = 'u8[65536]{0}', space=vmem, size = 0x10000, scoped, tag = 'input window, operand 6, single buffered']
    #allocation8 [shape = 's32[1]{0}', space=sflag, size = 0x4, scoped, tag = 'scoped memory for _critic_call.1']
    %13 = vsyncpa [#allocation3], 0
    %14 = vsyncpa [#allocation5], 0
    %15 = vsyncpa [#allocation8], 0
    // Predicated region
    $region2: #{_critic_call.1} parent=1 // pred_check
      _
    $region3: #{_critic_call.1} parent=1 // pred_check_branch
      %17 = sbr.rel (0) target = $region5
    $region4: #{_critic_call.1} parent=1 // pred_region
      _
    $region5: #{_critic_call.1} parent=1 // pred_fallthru
      _
    // Predicated region
    $region6: #{_critic_call.1} parent=1 // pred_check
      _
    $region7: #{_critic_call.1} parent=1 // pred_check_branch
      %19 = sbr.rel (0) target = $region9
    $region8: #{_critic_call.1} parent=1 // pred_region
      _
    $region9: #{_critic_call.1} parent=1 // pred_fallthru
      _
    // Predicated region
    $region10: #{_critic_call.1} parent=1 // pred_check
      _
    $region11: #{_critic_call.1} parent=1 // pred_check_branch
      %21 = sbr.rel (0) target = $region13
    $region12: #{_critic_call.1} parent=1 // pred_region
      %s23 = ssub.s32 704, 704
      %24 = vsyncadd [#allocation3], %s23
      %s25 = sshll.u32 [#allocation2], 4
      %s26 = int_to_ptr.vmem [resolvable:$true] %s25
      %31 = dma.hbm_to_vmem [thread:$0]  %s2, 704, %s26, [#allocation3], 64, 64, 4
    $region13: #{_critic_call.1} parent=1 // pred_fallthru
      _
    // Predicated region
    $region14: #{_critic_call.1} parent=1 // pred_check
      _
    $region15: #{_critic_call.1} parent=1 // pred_check_branch
      %33 = sbr.rel (0) target = $region17
    $region16: #{_critic_call.1} parent=1 // pred_region
      _
    $region17: #{_critic_call.1} parent=1 // pred_fallthru
      _
    // Predicated region
    $region18: #{_critic_call.1} parent=1 // pred_check
      _
    $region19: #{_critic_call.1} parent=1 // pred_check_branch
      %35 = sbr.rel (0) target = $region21
    $region20: #{_critic_call.1} parent=1 // pred_region
      %s37 = ssub.s32 2048, 2048
      %38 = vsyncadd [#allocation5], %s37
      %s39 = sshll.u32 [#allocation4], 4
      %s40 = int_to_ptr.vmem [resolvable:$true] %s39
      %45 = dma.hbm_to_vmem [thread:$0]  %s4, 2048, %s40, [#allocation5], 128, 128, 8
    $region21: #{_critic_call.1} parent=1 // pred_fallthru
      _
    // Predicated region
    $region22: #{_critic_call.1} parent=1 // pred_check
      _
    $region23: #{_critic_call.1} parent=1 // pred_check_branch
      %47 = sbr.rel (0) target = $region25
    $region24: #{_critic_call.1} parent=1 // pred_region
      %s49 = ssub.s32 4096, 4096
      %50 = vsyncadd [#allocation5], %s49
      %s51 = sshll.u32 [#allocation6], 4
      %s52 = int_to_ptr.vmem [resolvable:$true] %s51
      %57 = dma.hbm_to_vmem [thread:$0]  %s5, 4096, %s52, [#allocation5], 128, 128, 8
    $region25: #{_critic_call.1} parent=1 // pred_fallthru
      _
    // Predicated region
    $region26: #{_critic_call.1} parent=1 // pred_check
      _
    $region27: #{_critic_call.1} parent=1 // pred_check_branch
      %59 = sbr.rel (0) target = $region29
    $region28: #{_critic_call.1} parent=1 // pred_region
      %s61 = ssub.s32 2048, 2048
      %62 = vsyncadd [#allocation8], %s61
      %s63 = sshll.u32 [#allocation7], 4
      %s64 = int_to_ptr.vmem [resolvable:$true] %s63
      %69 = dma.hbm_to_vmem [thread:$0]  %s6, 2048, %s64, [#allocation8], 64, 64, 4
    $region29: #{_critic_call.1} parent=1 // pred_fallthru
      _
    // Predicated region
    $region30: #{_critic_call.1} parent=1 // pred_check
      _
    $region31: #{_critic_call.1} parent=1 // pred_check_branch
      %71 = sbr.rel (0) target = $region33
    $region32: #{_critic_call.1} parent=1 // pred_region
      _
    $region33: #{_critic_call.1} parent=1 // pred_fallthru
      _
    // Predicated region
    $region34: #{_critic_call.1} parent=1 // pred_check
      _
    $region35: #{_critic_call.1} parent=1 // pred_check_branch
      %73 = sbr.rel (0) target = $region37
    $region36: #{_critic_call.1} parent=1 // pred_region
      %74 = dma.done [#allocation3], 704
    $region37: #{_critic_call.1} parent=1 // pred_fallthru
      _
    // Predicated region
    $region38: #{_critic_call.1} parent=1 // pred_check
      _
    $region39: #{_critic_call.1} parent=1 // pred_check_branch
      %76 = sbr.rel (0) target = $region41
    $region40: #{_critic_call.1} parent=1 // pred_region
      %77 = dma.done [#allocation5], 2048
    $region41: #{_critic_call.1} parent=1 // pred_fallthru
      _
    // Predicated region
    $region42: #{_critic_call.1} parent=1 // pred_check
      _
    $region43: #{_critic_call.1} parent=1 // pred_check_branch
      %79 = sbr.rel (0) target = $region45
    $region44: #{_critic_call.1} parent=1 // pred_region
      %80 = dma.done [#allocation5], 4096
    $region45: #{_critic_call.1} parent=1 // pred_fallthru
      _
    // Predicated region
    $region46: #{_critic_call.1} parent=1 // pred_check
      _
    $region47: #{_critic_call.1} parent=1 // pred_check_branch
      %82 = sbr.rel (0) target = $region49
    $region48: #{_critic_call.1} parent=1 // pred_region
      %83 = dma.done [#allocation8], 2048
    $region49: #{_critic_call.1} parent=1 // pred_fallthru
      _
    %v85 = vld [vmem:[%s0] sm:$0xff]
    %v86 = vld [vmem:[%s0 + $0x8] sm:$0xff]
    %v87 = vld [vmem:[%s0 + $0x10] sm:$0xff]
    %v88 = vld [vmem:[%s0 + $0x18] sm:$0xff]
    %v89 = vld [vmem:[%s0 + $0x20] sm:$0xff]
    %v90 = vld [vmem:[%s0 + $0x28] sm:$0xff]
    %v91 = vld [vmem:[%s0 + $0x30] sm:$0xff]
    %v92 = vld [vmem:[%s0 + $0x38] sm:$0xff]
    %v93 = vpack.c.bf16 %v86, %v85
    %v94 = vpack.c.bf16 %v88, %v87
    %v95 = vpack.c.bf16 %v90, %v89
    %v96 = vpack.c.bf16 %v92, %v91
    %v97 = vld [vmem:[%s1] sm:$0xff]
    %v98 = vld [vmem:[%s1 + $0x8] sm:$0xff]
    %v99 = vld [vmem:[%s1 + $0x10] sm:$0xff]
    %v100 = vld [vmem:[%s1 + $0x18] sm:$0xff]
    %v101 = vld [vmem:[%s1 + $0x20] sm:$0xff]
    %v102 = vld [vmem:[%s1 + $0x28] sm:$0xff]
    %v103 = vld [vmem:[%s1 + $0x30] sm:$0xff]
    %v104 = vld [vmem:[%s1 + $0x38] sm:$0xff]
    %v105 = vpack.c.bf16 %v98, %v97
    %v106 = vpack.c.bf16 %v100, %v99
    %v107 = vpack.c.bf16 %v102, %v101
    %v108 = vpack.c.bf16 %v104, %v103
    %v109 = vld [vmem:[%s7] ss:$0 sm:$0xff]
    %v110 = vld [vmem:[%s7 + $0x1] ss:$0 sm:$0xff]
    %v111 = vld [vmem:[%s7 + $0x2] ss:$0 sm:$0xff]
    %s112 = scalar_lea.vmem %s7, 3
    %v113 = vld [vmem:[%s112] ss:$8 sm:$0x3]
    %s114 = scalar_lea.vmem %s7, 4
    %v115 = vld [vmem:[%s114] ss:$8 sm:$0x3]
    %v116 = vld [vmem:[%s7 + $0x5] ss:$0 sm:$0xff]
    %v117 = vld [vmem:[#allocation2] sm:$0xf]
    %v118 = vld [vmem:[#allocation2 + $0x4] sm:$0xf]
    %v119 = vld [vmem:[#allocation2 + $0x8] sm:$0xf]
    %v120 = vld [vmem:[#allocation2 + $0xc] sm:$0xf]
    %v121 = vld [vmem:[#allocation2 + $0x10] sm:$0xf]
    %v122 = vld [vmem:[#allocation2 + $0x14] sm:$0xf]
    %v123 = vld [vmem:[#allocation2 + $0x18] sm:$0xf]
    %v124 = vld [vmem:[#allocation2 + $0x1c] sm:$0xf]
    %v125 = vld [vmem:[#allocation2 + $0x20] sm:$0xf]
    %v126 = vld [vmem:[#allocation2 + $0x24] sm:$0xf]
    %v127 = vld [vmem:[#allocation2 + $0x28] sm:$0x3]
    %v139 = vunpack.c.l.b16 %v117
    %v140 = vunpack.c.l.b16 %v118
    %v141 = vunpack.c.l.b16 %v119
    %v142 = vunpack.c.l.b16 %v120
    %v143 = vunpack.c.l.b16 %v121
    %v144 = vunpack.c.l.b16 %v122
    %v145 = vunpack.c.l.b16 %v123
    %v146 = vunpack.c.l.b16 %v124
    %v147 = vunpack.c.l.b16 %v125
    %v148 = vunpack.c.l.b16 %v126
    %v149 = vunpack.c.l.b16 %v127
    %v150 = vpack.c.b16 %v140, %v139
    %v151 = vpack.c.b16 %v142, %v141
    %v152 = vpack.c.b16 %v144, %v143
    %v153 = vpack.c.b16 %v146, %v145
    %v154 = vpack.c.b16 %v148, %v147
    %v155 = vpack.c.b16 %v149, %v149
    %vm161 = vcmask 687104
    %v163 = vsel %vm161, %v93, 0
    %v166 = vsel %vm161, %v94, 0
    %v169 = vsel %vm161, %v95, 0
    %v172 = vsel %vm161, %v96, 0
    %vm174 = vcmask 1041408
    %v176 = vsel %vm174, %v155, 0
    %178 = vmatprep.subr.bf16.mxu0 0
    %179 = vmatpush1.bf16.msra.mxu0 %v150
    %180 = vmatprep.subr.bf16.mxu0 0
    %181 = vmatpush1.bf16.msra.mxu0 %v151
    %182 = vmatprep.subr.bf16.mxu0 0
    %183 = vmatpush1.bf16.msra.mxu0 %v152
    %184 = vmatprep.subr.bf16.mxu0 0
    %185 = vmatpush1.bf16.msra.mxu0 %v153
    %186 = vmatprep.subr.bf16.mxu0 0
    %187 = vmatpush1.bf16.msra.mxu0 %v154
    %188 = vmatprep.subr.bf16.mxu0 0
    %189 = vmatpush1.bf16.msra.mxu0 %v176
    %190 = vmatprep.subr.bf16.mxu0 0
    %191 = vmatpush1.bf16.msra.mxu0 0
    %192 = vmatprep.subr.bf16.mxu0 0
    %193 = vmatpush1.bf16.msra.mxu0 0
    %194 = vmatprep.subr.bf16.mxu0 0
    %195 = vmatpush1.bf16.msra.mxu0 0
    %196 = vmatprep.subr.bf16.mxu0 0
    %197 = vmatpush1.bf16.msra.mxu0 0
    %198 = vmatprep.subr.bf16.mxu0 0
    %199 = vmatpush1.bf16.msra.mxu0 0
    %200 = vmatprep.subr.bf16.mxu0 0
    %201 = vmatpush1.bf16.msra.mxu0 0
    %202 = vmatprep.subr.bf16.mxu0 0
    %203 = vmatpush1.bf16.msra.mxu0 0
    %204 = vmatprep.subr.bf16.mxu0 0
    %205 = vmatpush1.bf16.msra.mxu0 0
    %206 = vmatprep.subr.bf16.mxu0 0
    %207 = vmatpush1.bf16.msra.mxu0 0
    %208 = vmatprep.subr.bf16.mxu0 0
    %209 = vmatpush1.bf16.msra.mxu0 0
    %210 = vmatprep.mubr.bf16.mxu0 0
    %211 = vmatmul.mubr.bf16.gmra.mrb[0].mxu0 %v163
    %v212 = vpop.f32.mrb[0].mxu0
    %v213 = vadd.f32 %v109, %v212
    %v214 = vpop.f32.mrb[0].mxu0
    %v215 = vpop.f32.mrb[0].mxu0
    %v216 = vadd.f32 %v109, %v215
    %v217 = vpop.f32.mrb[0].mxu0
    %218 = vmatprep.mubr.bf16.mxu0 0
    %219 = vmatmul.mubr.bf16.gmra.mrb[0].mxu0 %v166
    %v220 = vpop.f32.mrb[0].mxu0
    %v221 = vadd.f32 %v109, %v220
    %v222 = vpop.f32.mrb[0].mxu0
    %v223 = vpop.f32.mrb[0].mxu0
    %v224 = vadd.f32 %v109, %v223
    %v225 = vpop.f32.mrb[0].mxu0
    %226 = vmatprep.mubr.bf16.mxu0 0
    %227 = vmatmul.mubr.bf16.gmra.mrb[0].mxu0 %v169
    %v228 = vpop.f32.mrb[0].mxu0
    %v229 = vadd.f32 %v109, %v228
    %v230 = vpop.f32.mrb[0].mxu0
    %v231 = vpop.f32.mrb[0].mxu0
    %v232 = vadd.f32 %v109, %v231
    %v233 = vpop.f32.mrb[0].mxu0
    %234 = vmatprep.mubr.bf16.mxu0 0
    %235 = vmatmul.mubr.bf16.gmra.mrb[0].mxu0 %v172
    %v236 = vpop.f32.mrb[0].mxu0
    %v237 = vadd.f32 %v109, %v236
    %v238 = vpop.f32.mrb[0].mxu0
    %v239 = vpop.f32.mrb[0].mxu0
    %v240 = vadd.f32 %v109, %v239
    %v241 = vpop.f32.mrb[0].mxu0
    %242 = vdwg.mxu0
    %243 = vadd.xlane.f32.xlu0 %v213
    %v244 = vpop.xlane.xlu0 %243
    %245 = vadd.xlane.f32.xlu0 %v216
    %v246 = vpop.xlane.xlu0 %245
    %247 = vadd.xlane.f32.xlu0 %v221
    %v248 = vpop.xlane.xlu0 %247
    %249 = vadd.xlane.f32.xlu0 %v224
    %v250 = vpop.xlane.xlu0 %249
    %251 = vadd.xlane.f32.xlu0 %v229
    %v252 = vpop.xlane.xlu0 %251
    %253 = vadd.xlane.f32.xlu0 %v232
    %v254 = vpop.xlane.xlu0 %253
    %255 = vadd.xlane.f32.xlu0 %v237
    %v256 = vpop.xlane.xlu0 %255
    %257 = vadd.xlane.f32.xlu0 %v240
    %v258 = vpop.xlane.xlu0 %257
    %v259 = vmul.f32 %v244, 0.02
    %v260 = vmul.f32 %v246, 0.02
    %v261 = vmul.f32 %v248, 0.02
    %v262 = vmul.f32 %v250, 0.02
    %v263 = vmul.f32 %v252, 0.02
    %v264 = vmul.f32 %v254, 0.02
    %v265 = vmul.f32 %v256, 0.02
    %v266 = vmul.f32 %v258, 0.02
    %v267 = vmul.f32 %v213, %v213
    %v268 = vmul.f32 %v216, %v216
    %v269 = vmul.f32 %v221, %v221
    %v270 = vmul.f32 %v224, %v224
    %v271 = vmul.f32 %v229, %v229
    %v272 = vmul.f32 %v232, %v232
    %v273 = vmul.f32 %v237, %v237
    %v274 = vmul.f32 %v240, %v240
    %275 = vadd.xlane.f32.xlu0 %v267
    %v276 = vpop.xlane.xlu0 %275
    %277 = vadd.xlane.f32.xlu0 %v268
    %v278 = vpop.xlane.xlu0 %277
    %279 = vadd.xlane.f32.xlu0 %v269
    %v280 = vpop.xlane.xlu0 %279
    %281 = vadd.xlane.f32.xlu0 %v270
    %v282 = vpop.xlane.xlu0 %281
    %283 = vadd.xlane.f32.xlu0 %v271
    %v284 = vpop.xlane.xlu0 %283
    %285 = vadd.xlane.f32.xlu0 %v272
    %v286 = vpop.xlane.xlu0 %285
    %287 = vadd.xlane.f32.xlu0 %v273
    %v288 = vpop.xlane.xlu0 %287
    %289 = vadd.xlane.f32.xlu0 %v274
    %v290 = vpop.xlane.xlu0 %289
    %v291 = vmul.f32 %v276, 0.02
    %v292 = vmul.f32 %v278, 0.02
    %v293 = vmul.f32 %v280, 0.02
    %v294 = vmul.f32 %v282, 0.02
    %v295 = vmul.f32 %v284, 0.02
    %v296 = vmul.f32 %v286, 0.02
    %v297 = vmul.f32 %v288, 0.02
    %v298 = vmul.f32 %v290, 0.02
    %v299 = vmul.f32 %v259, %v259
    %v300 = vmul.f32 %v260, %v260
    %v301 = vmul.f32 %v261, %v261
    %v302 = vmul.f32 %v262, %v262
    %v303 = vmul.f32 %v263, %v263
    %v304 = vmul.f32 %v264, %v264
    %v305 = vmul.f32 %v265, %v265
    %v306 = vmul.f32 %v266, %v266
    %v307 = vsub.f32 %v291, %v299
    %v308 = vsub.f32 %v292, %v300
    %v309 = vsub.f32 %v293, %v301
    %v310 = vsub.f32 %v294, %v302
    %v311 = vsub.f32 %v295, %v303
    %v312 = vsub.f32 %v296, %v304
    %v313 = vsub.f32 %v297, %v305
    %v314 = vsub.f32 %v298, %v306
    %v315 = vsub.f32 %v213, %v259
    %v316 = vsub.f32 %v216, %v260
    %v317 = vsub.f32 %v221, %v261
    %v318 = vsub.f32 %v224, %v262
    %v319 = vsub.f32 %v229, %v263
    %v320 = vsub.f32 %v232, %v264
    %v321 = vsub.f32 %v237, %v265
    %v322 = vsub.f32 %v240, %v266
    %v323 = vadd.f32 %v307, 1e-05
    %v324 = vadd.f32 %v308, 1e-05
    %v325 = vadd.f32 %v309, 1e-05
    %v326 = vadd.f32 %v310, 1e-05
    %v327 = vadd.f32 %v311, 1e-05
    %v328 = vadd.f32 %v312, 1e-05
    %v329 = vadd.f32 %v313, 1e-05
    %v330 = vadd.f32 %v314, 1e-05
    %v331 = vrsqrt.pop %v323
    %v332 = vrsqrt.pop %v324
    %v333 = vrsqrt.pop %v325
    %v334 = vrsqrt.pop %v326
    %v335 = vrsqrt.pop %v327
    %v336 = vrsqrt.pop %v328
    %v337 = vrsqrt.pop %v329
    %v338 = vrsqrt.pop %v330
    %v339 = vmul.f32 %v315, %v331
    %v340 = vmul.f32 %v316, %v332
    %v341 = vmul.f32 %v317, %v333
    %v342 = vmul.f32 %v318, %v334
    %v343 = vmul.f32 %v319, %v335
    %v344 = vmul.f32 %v320, %v336
    %v345 = vmul.f32 %v321, %v337
    %v346 = vmul.f32 %v322, %v338
    %v347 = vmul.f32 %v339, %v110
    %v348 = vmul.f32 %v340, %v110
    %v349 = vmul.f32 %v341, %v110
    %v350 = vmul.f32 %v342, %v110
    %v351 = vmul.f32 %v343, %v110
    %v352 = vmul.f32 %v344, %v110
    %v353 = vmul.f32 %v345, %v110
    %v354 = vmul.f32 %v346, %v110
    %v355 = vadd.f32 %v347, %v111
    %v356 = vadd.f32 %v348, %v111
    %v357 = vadd.f32 %v349, %v111
    %v358 = vadd.f32 %v350, %v111
    %v359 = vadd.f32 %v351, %v111
    %v360 = vadd.f32 %v352, %v111
    %v361 = vadd.f32 %v353, %v111
    %v362 = vadd.f32 %v354, %v111
    %v363 = vtanh.pop %v355
    %v364 = vtanh.pop %v356
    %v365 = vtanh.pop %v357
    %v366 = vtanh.pop %v358
    %v367 = vtanh.pop %v359
    %v368 = vtanh.pop %v360
    %v369 = vtanh.pop %v361
    %v370 = vtanh.pop %v362
    %v371 = vpack.c.bf16 %v364, %v363
    %v372 = vpack.c.bf16 %v366, %v365
    %v373 = vpack.c.bf16 %v368, %v367
    %v374 = vpack.c.bf16 %v370, %v369
    %v375 = vld [vmem:[%s3] sm:$0xff]
    %v376 = vld [vmem:[%s3 + $0x8] sm:$0xff]
    %v377 = vld [vmem:[%s3 + $0x10] sm:$0xff]
    %v378 = vld [vmem:[%s3 + $0x18] sm:$0xff]
    %v379 = vld [vmem:[%s3 + $0x20] sm:$0xff]
    %v380 = vld [vmem:[%s3 + $0x28] sm:$0xff]
    %v381 = vld [vmem:[%s3 + $0x30] sm:$0xff]
    %v382 = vld [vmem:[%s3 + $0x38] sm:$0xff]
    %v383 = vld [vmem:[%s3 + $0x40] sm:$0xff]
    %v384 = vld [vmem:[%s3 + $0x48] sm:$0xff]
    %v385 = vld [vmem:[%s3 + $0x50] sm:$0xff]
    %v386 = vld [vmem:[%s3 + $0x58] sm:$0xff]
    %v387 = vld [vmem:[%s3 + $0x60] sm:$0xff]
    %v388 = vld [vmem:[%s3 + $0x68] sm:$0xff]
    %v389 = vld [vmem:[%s3 + $0x70] sm:$0xff]
    %v390 = vld [vmem:[%s3 + $0x78] sm:$0xff]
    %v391 = vld [vmem:[#allocation4] sm:$0xff]
    %v392 = vld [vmem:[#allocation4 + $0x8] sm:$0xff]
    %v393 = vld [vmem:[#allocation4 + $0x10] sm:$0xff]
    %v394 = vld [vmem:[#allocation4 + $0x18] sm:$0xff]
    %v395 = vld [vmem:[#allocation4 + $0x20] sm:$0xff]
    %v396 = vld [vmem:[#allocation4 + $0x28] sm:$0xff]
    %v397 = vld [vmem:[#allocation4 + $0x30] sm:$0xff]
    %v398 = vld [vmem:[#allocation4 + $0x38] sm:$0xff]
    %v399 = vld [vmem:[#allocation4 + $0x40] sm:$0xff]
    %v400 = vld [vmem:[#allocation4 + $0x48] sm:$0xff]
    %v401 = vld [vmem:[#allocation4 + $0x50] sm:$0xff]
    %v402 = vld [vmem:[#allocation4 + $0x58] sm:$0xff]
    %v403 = vld [vmem:[#allocation4 + $0x60] sm:$0xff]
    %v404 = vld [vmem:[#allocation4 + $0x68] sm:$0xff]
    %v405 = vld [vmem:[#allocation4 + $0x70] sm:$0xff]
    %v406 = vld [vmem:[#allocation4 + $0x78] sm:$0xff]
    %v423 = vunpack.c.l.b16 %v391
    %v424 = vunpack.c.h.b16 %v391
    %v425 = vunpack.c.l.b16 %v392
    %v426 = vunpack.c.h.b16 %v392
    %v427 = vunpack.c.l.b16 %v393
    %v428 = vunpack.c.h.b16 %v393
    %v429 = vunpack.c.l.b16 %v394
    %v430 = vunpack.c.h.b16 %v394
    %v431 = vunpack.c.l.b16 %v395
    %v432 = vunpack.c.h.b16 %v395
    %v433 = vunpack.c.l.b16 %v396
    %v434 = vunpack.c.h.b16 %v396
    %v435 = vunpack.c.l.b16 %v397
    %v436 = vunpack.c.h.b16 %v397
    %v437 = vunpack.c.l.b16 %v398
    %v438 = vunpack.c.h.b16 %v398
    %v439 = vunpack.c.l.b16 %v399
    %v440 = vunpack.c.h.b16 %v399
    %v441 = vunpack.c.l.b16 %v400
    %v442 = vunpack.c.h.b16 %v400
    %v443 = vunpack.c.l.b16 %v401
    %v444 = vunpack.c.h.b16 %v401
    %v445 = vunpack.c.l.b16 %v402
    %v446 = vunpack.c.h.b16 %v402
    %v447 = vunpack.c.l.b16 %v403
    %v448 = vunpack.c.h.b16 %v403
    %v449 = vunpack.c.l.b16 %v404
    %v450 = vunpack.c.h.b16 %v404
    %v451 = vunpack.c.l.b16 %v405
    %v452 = vunpack.c.h.b16 %v405
    %v453 = vunpack.c.l.b16 %v406
    %v454 = vunpack.c.h.b16 %v406
    %v455 = vpack.c.b16 %v425, %v423
    %v456 = vpack.c.b16 %v426, %v424
    %v457 = vpack.c.b16 %v429, %v427
    %v458 = vpack.c.b16 %v430, %v428
    %v459 = vpack.c.b16 %v433, %v431
    %v460 = vpack.c.b16 %v434, %v432
    %v461 = vpack.c.b16 %v437, %v435
    %v462 = vpack.c.b16 %v438, %v436
    %v463 = vpack.c.b16 %v441, %v439
    %v464 = vpack.c.b16 %v442, %v440
    %v465 = vpack.c.b16 %v445, %v443
    %v466 = vpack.c.b16 %v446, %v444
    %v467 = vpack.c.b16 %v449, %v447
    %v468 = vpack.c.b16 %v450, %v448
    %v469 = vpack.c.b16 %v453, %v451
    %v470 = vpack.c.b16 %v454, %v452
    %487 = vmatprep.subr.bf16.mxu0 %v456
    %488 = vmatpush1.bf16.msra.mxu0 %v455
    %489 = vmatprep.subr.bf16.mxu0 %v458
    %490 = vmatpush1.bf16.msra.mxu0 %v457
    %491 = vmatprep.subr.bf16.mxu0 %v460
    %492 = vmatpush1.bf16.msra.mxu0 %v459
    %493 = vmatprep.subr.bf16.mxu0 %v462
    %494 = vmatpush1.bf16.msra.mxu0 %v461
    %495 = vmatprep.subr.bf16.mxu0 %v464
    %496 = vmatpush1.bf16.msra.mxu0 %v463
    %497 = vmatprep.subr.bf16.mxu0 %v466
    %498 = vmatpush1.bf16.msra.mxu0 %v465
    %499 = vmatprep.subr.bf16.mxu0 %v468
    %500 = vmatpush1.bf16.msra.mxu0 %v467
    %501 = vmatprep.subr.bf16.mxu0 %v470
    %502 = vmatpush1.bf16.msra.mxu0 %v469
    %503 = vmatprep.subr.bf16.mxu0 0
    %504 = vmatpush1.bf16.msra.mxu0 0
    %505 = vmatprep.subr.bf16.mxu0 0
    %506 = vmatpush1.bf16.msra.mxu0 0
    %507 = vmatprep.subr.bf16.mxu0 0
    %508 = vmatpush1.bf16.msra.mxu0 0
    %509 = vmatprep.subr.bf16.mxu0 0
    %510 = vmatpush1.bf16.msra.mxu0 0
    %511 = vmatprep.subr.bf16.mxu0 0
    %512 = vmatpush1.bf16.msra.mxu0 0
    %513 = vmatprep.subr.bf16.mxu0 0
    %514 = vmatpush1.bf16.msra.mxu0 0
    %515 = vmatprep.subr.bf16.mxu0 0
    %516 = vmatpush1.bf16.msra.mxu0 0
    %517 = vmatprep.subr.bf16.mxu0 0
    %518 = vmatpush1.bf16.msra.mxu0 0
    %519 = vmatprep.mubr.bf16.mxu0 0
    %520 = vmatmul.mubr.bf16.gmra.mrb[0].mxu0 %v105
    %v521 = vpop.f32.mrb[0].mxu0
    %v522 = vadd.f32 0.0, %v521
    %v523 = vpop.f32.mrb[0].mxu0
    %v524 = vadd.f32 0.0, %v523
    %v525 = vpop.f32.mrb[0].mxu0
    %v526 = vadd.f32 0.0, %v525
    %v527 = vpop.f32.mrb[0].mxu0
    %v528 = vadd.f32 0.0, %v527
    %529 = vmatprep.mubr.bf16.mxu0 0
    %530 = vmatmul.mubr.bf16.gmra.mrb[0].mxu0 %v106
    %v531 = vpop.f32.mrb[0].mxu0
    %v532 = vadd.f32 0.0, %v531
    %v533 = vpop.f32.mrb[0].mxu0
    %v534 = vadd.f32 0.0, %v533
    %v535 = vpop.f32.mrb[0].mxu0
    %v536 = vadd.f32 0.0, %v535
    %v537 = vpop.f32.mrb[0].mxu0
    %v538 = vadd.f32 0.0, %v537
    %539 = vmatprep.mubr.bf16.mxu0 0
    %540 = vmatmul.mubr.bf16.gmra.mrb[0].mxu0 %v107
    %v541 = vpop.f32.mrb[0].mxu0
    %v542 = vadd.f32 0.0, %v541
    %v543 = vpop.f32.mrb[0].mxu0
    %v544 = vadd.f32 0.0, %v543
    %v545 = vpop.f32.mrb[0].mxu0
    %v546 = vadd.f32 0.0, %v545
    %v547 = vpop.f32.mrb[0].mxu0
    %v548 = vadd.f32 0.0, %v547
    %549 = vmatprep.mubr.bf16.mxu0 0
    %550 = vmatmul.mubr.bf16.gmra.mrb[0].mxu0 %v108
    %v551 = vpop.f32.mrb[0].mxu0
    %v552 = vadd.f32 0.0, %v551
    %v553 = vpop.f32.mrb[0].mxu0
    %v554 = vadd.f32 0.0, %v553
    %v555 = vpop.f32.mrb[0].mxu0
    %v556 = vadd.f32 0.0, %v555
    %v557 = vpop.f32.mrb[0].mxu0
    %v558 = vadd.f32 0.0, %v557
    %559 = vdwg.mxu0
    %v576 = vunpack.c.l.b16 %v375
    %v577 = vunpack.c.h.b16 %v375
    %v578 = vunpack.c.l.b16 %v376
    %v579 = vunpack.c.h.b16 %v376
    %v580 = vunpack.c.l.b16 %v377
    %v581 = vunpack.c.h.b16 %v377
    %v582 = vunpack.c.l.b16 %v378
    %v583 = vunpack.c.h.b16 %v378
    %v584 = vunpack.c.l.b16 %v379
    %v585 = vunpack.c.h.b16 %v379
    %v586 = vunpack.c.l.b16 %v380
    %v587 = vunpack.c.h.b16 %v380
    %v588 = vunpack.c.l.b16 %v381
    %v589 = vunpack.c.h.b16 %v381
    %v590 = vunpack.c.l.b16 %v382
    %v591 = vunpack.c.h.b16 %v382
    %v592 = vunpack.c.l.b16 %v383
    %v593 = vunpack.c.h.b16 %v383
    %v594 = vunpack.c.l.b16 %v384
    %v595 = vunpack.c.h.b16 %v384
    %v596 = vunpack.c.l.b16 %v385
    %v597 = vunpack.c.h.b16 %v385
    %v598 = vunpack.c.l.b16 %v386
    %v599 = vunpack.c.h.b16 %v386
    %v600 = vunpack.c.l.b16 %v387
    %v601 = vunpack.c.h.b16 %v387
    %v602 = vunpack.c.l.b16 %v388
    %v603 = vunpack.c.h.b16 %v388
    %v604 = vunpack.c.l.b16 %v389
    %v605 = vunpack.c.h.b16 %v389
    %v606 = vunpack.c.l.b16 %v390
    %v607 = vunpack.c.h.b16 %v390
    %v608 = vpack.c.b16 %v578, %v576
    %v609 = vpack.c.b16 %v579, %v577
    %v610 = vpack.c.b16 %v582, %v580
    %v611 = vpack.c.b16 %v583, %v581
    %v612 = vpack.c.b16 %v586, %v584
    %v613 = vpack.c.b16 %v587, %v585
    %v614 = vpack.c.b16 %v590, %v588
    %v615 = vpack.c.b16 %v591, %v589
    %v616 = vpack.c.b16 %v594, %v592
    %v617 = vpack.c.b16 %v595, %v593
    %v618 = vpack.c.b16 %v598, %v596
    %v619 = vpack.c.b16 %v599, %v597
    %v620 = vpack.c.b16 %v602, %v600
    %v621 = vpack.c.b16 %v603, %v601
    %v622 = vpack.c.b16 %v606, %v604
    %v623 = vpack.c.b16 %v607, %v605
    %640 = vmatprep.subr.bf16.mxu0 %v609
    %641 = vmatpush1.bf16.msra.mxu0 %v608
    %642 = vmatprep.subr.bf16.mxu0 %v611
    %643 = vmatpush1.bf16.msra.mxu0 %v610
    %644 = vmatprep.subr.bf16.mxu0 %v613
    %645 = vmatpush1.bf16.msra.mxu0 %v612
    %646 = vmatprep.subr.bf16.mxu0 %v615
    %647 = vmatpush1.bf16.msra.mxu0 %v614
    %648 = vmatprep.subr.bf16.mxu0 %v617
    %649 = vmatpush1.bf16.msra.mxu0 %v616
    %650 = vmatprep.subr.bf16.mxu0 %v619
    %651 = vmatpush1.bf16.msra.mxu0 %v618
    %652 = vmatprep.subr.bf16.mxu0 %v621
    %653 = vmatpush1.bf16.msra.mxu0 %v620
    %654 = vmatprep.subr.bf16.mxu0 %v623
    %655 = vmatpush1.bf16.msra.mxu0 %v622
    %656 = vmatprep.subr.bf16.mxu0 0
    %657 = vmatpush1.bf16.msra.mxu0 0
    %658 = vmatprep.subr.bf16.mxu0 0
    %659 = vmatpush1.bf16.msra.mxu0 0
    %660 = vmatprep.subr.bf16.mxu0 0
    %661 = vmatpush1.bf16.msra.mxu0 0
    %662 = vmatprep.subr.bf16.mxu0 0
    %663 = vmatpush1.bf16.msra.mxu0 0
    %664 = vmatprep.subr.bf16.mxu0 0
    %665 = vmatpush1.bf16.msra.mxu0 0
    %666 = vmatprep.subr.bf16.mxu0 0
    %667 = vmatpush1.bf16.msra.mxu0 0
    %668 = vmatprep.subr.bf16.mxu0 0
    %669 = vmatpush1.bf16.msra.mxu0 0
    %670 = vmatprep.subr.bf16.mxu0 0
    %671 = vmatpush1.bf16.msra.mxu0 0
    %672 = vmatprep.mubr.bf16.mxu0 0
    %673 = vmatmul.mubr.bf16.gmra.mrb[0].mxu0 %v371
    %v674 = vpop.f32.mrb[0].mxu0
    %v675 = vadd.f32 %v522, %v674
    %v676 = vpop.f32.mrb[0].mxu0
    %v677 = vadd.f32 %v524, %v676
    %v678 = vpop.f32.mrb[0].mxu0
    %v679 = vadd.f32 %v526, %v678
    %v680 = vpop.f32.mrb[0].mxu0
    %v681 = vadd.f32 %v528, %v680
    %682 = vmatprep.mubr.bf16.mxu0 0
    %683 = vmatmul.mubr.bf16.gmra.mrb[0].mxu0 %v372
    %v684 = vpop.f32.mrb[0].mxu0
    %v685 = vadd.f32 %v532, %v684
    %v686 = vpop.f32.mrb[0].mxu0
    %v687 = vadd.f32 %v534, %v686
    %v688 = vpop.f32.mrb[0].mxu0
    %v689 = vadd.f32 %v536, %v688
    %v690 = vpop.f32.mrb[0].mxu0
    %v691 = vadd.f32 %v538, %v690
    %692 = vmatprep.mubr.bf16.mxu0 0
    %693 = vmatmul.mubr.bf16.gmra.mrb[0].mxu0 %v373
    %v694 = vpop.f32.mrb[0].mxu0
    %v695 = vadd.f32 %v542, %v694
    %v696 = vpop.f32.mrb[0].mxu0
    %v697 = vadd.f32 %v544, %v696
    %v698 = vpop.f32.mrb[0].mxu0
    %v699 = vadd.f32 %v546, %v698
    %v700 = vpop.f32.mrb[0].mxu0
    %v701 = vadd.f32 %v548, %v700
    %702 = vmatprep.mubr.bf16.mxu0 0
    %703 = vmatmul.mubr.bf16.gmra.mrb[0].mxu0 %v374
    %v704 = vpop.f32.mrb[0].mxu0
    %v705 = vadd.f32 %v552, %v704
    %v706 = vpop.f32.mrb[0].mxu0
    %v707 = vadd.f32 %v554, %v706
    %v708 = vpop.f32.mrb[0].mxu0
    %v709 = vadd.f32 %v556, %v708
    %v710 = vpop.f32.mrb[0].mxu0
    %v711 = vadd.f32 %v558, %v710
    %712 = vdwg.mxu0
    %v714 = vlaneseq
    %v715 = vshrl.u32 %v714, 7
    %v716 = vsub.s32 0, %v715
    %v717 = vrot.slane %v113, %v716
    %v718 = vlaneseq
    %v719 = vshrl.u32 %v718, 7
    %v720 = vsub.s32 1, %v719
    %v721 = vrot.slane %v113, %v720
    %v724 = vadd.f32 %v675, %v717
    %v725 = vadd.f32 %v677, %v721
    %v726 = vadd.f32 %v679, %v717
    %v727 = vadd.f32 %v681, %v721
    %v728 = vadd.f32 %v685, %v717
    %v729 = vadd.f32 %v687, %v721
    %v730 = vadd.f32 %v689, %v717
    %v731 = vadd.f32 %v691, %v721
    %v732 = vadd.f32 %v695, %v717
    %v733 = vadd.f32 %v697, %v721
    %v734 = vadd.f32 %v699, %v717
    %v735 = vadd.f32 %v701, %v721
    %v736 = vadd.f32 %v705, %v717
    %v737 = vadd.f32 %v707, %v721
    %v738 = vadd.f32 %v709, %v717
    %v739 = vadd.f32 %v711, %v721
    %v740 = vmax.f32 %v724, 0.0
    %v741 = vmax.f32 %v725, 0.0
    %v742 = vmax.f32 %v726, 0.0
    %v743 = vmax.f32 %v727, 0.0
    %v744 = vmax.f32 %v728, 0.0
    %v745 = vmax.f32 %v729, 0.0
    %v746 = vmax.f32 %v730, 0.0
    %v747 = vmax.f32 %v731, 0.0
    %v748 = vmax.f32 %v732, 0.0
    %v749 = vmax.f32 %v733, 0.0
    %v750 = vmax.f32 %v734, 0.0
    %v751 = vmax.f32 %v735, 0.0
    %v752 = vmax.f32 %v736, 0.0
    %v753 = vmax.f32 %v737, 0.0
    %v754 = vmax.f32 %v738, 0.0
    %v755 = vmax.f32 %v739, 0.0
    %v756 = vpack.c.bf16 %v742, %v740
    %v757 = vpack.c.bf16 %v743, %v741
    %v758 = vpack.c.bf16 %v746, %v744
    %v759 = vpack.c.bf16 %v747, %v745
    %v760 = vpack.c.bf16 %v750, %v748
    %v761 = vpack.c.bf16 %v751, %v749
    %v762 = vpack.c.bf16 %v754, %v752
    %v763 = vpack.c.bf16 %v755, %v753
    %v764 = vld [vmem:[#allocation6] sm:$0xff]
    %v765 = vld [vmem:[#allocation6 + $0x8] sm:$0xff]
    %v766 = vld [vmem:[#allocation6 + $0x10] sm:$0xff]
    %v767 = vld [vmem:[#allocation6 + $0x18] sm:$0xff]
    %v768 = vld [vmem:[#allocation6 + $0x20] sm:$0xff]
    %v769 = vld [vmem:[#allocation6 + $0x28] sm:$0xff]
    %v770 = vld [vmem:[#allocation6 + $0x30] sm:$0xff]
    %v771 = vld [vmem:[#allocation6 + $0x38] sm:$0xff]
    %v772 = vld [vmem:[#allocation6 + $0x40] sm:$0xff]
    %v773 = vld [vmem:[#allocation6 + $0x48] sm:$0xff]
    %v774 = vld [vmem:[#allocation6 + $0x50] sm:$0xff]
    %v775 = vld [vmem:[#allocation6 + $0x58] sm:$0xff]
    %v776 = vld [vmem:[#allocation6 + $0x60] sm:$0xff]
    %v777 = vld [vmem:[#allocation6 + $0x68] sm:$0xff]
    %v778 = vld [vmem:[#allocation6 + $0x70] sm:$0xff]
    %v779 = vld [vmem:[#allocation6 + $0x78] sm:$0xff]
    %v780 = vld [vmem:[#allocation6 + $0x80] sm:$0xff]
    %v781 = vld [vmem:[#allocation6 + $0x88] sm:$0xff]
    %v782 = vld [vmem:[#allocation6 + $0x90] sm:$0xff]
    %v783 = vld [vmem:[#allocation6 + $0x98] sm:$0xff]
    %v784 = vld [vmem:[#allocation6 + $0xa0] sm:$0xff]
    %v785 = vld [vmem:[#allocation6 + $0xa8] sm:$0xff]
    %v786 = vld [vmem:[#allocation6 + $0xb0] sm:$0xff]
    %v787 = vld [vmem:[#allocation6 + $0xb8] sm:$0xff]
    %v788 = vld [vmem:[#allocation6 + $0xc0] sm:$0xff]
    %v789 = vld [vmem:[#allocation6 + $0xc8] sm:$0xff]
    %v790 = vld [vmem:[#allocation6 + $0xd0] sm:$0xff]
    %v791 = vld [vmem:[#allocation6 + $0xd8] sm:$0xff]
    %v792 = vld [vmem:[#allocation6 + $0xe0] sm:$0xff]
    %v793 = vld [vmem:[#allocation6 + $0xe8] sm:$0xff]
    %v794 = vld [vmem:[#allocation6 + $0xf0] sm:$0xff]
    %v795 = vld [vmem:[#allocation6 + $0xf8] sm:$0xff]
    %v797 = vlaneseq
    %v798 = vshrl.u32 %v797, 7
    %v799 = vsub.s32 0, %v798
    %v800 = vrot.slane %v115, %v799
    %v801 = vlaneseq
    %v802 = vshrl.u32 %v801, 7
    %v803 = vsub.s32 1, %v802
    %v804 = vrot.slane %v115, %v803
    %v839 = vunpack.c.l.b16 %v764
    %v840 = vunpack.c.h.b16 %v764
    %v841 = vunpack.c.l.b16 %v765
    %v842 = vunpack.c.h.b16 %v765
    %v843 = vunpack.c.l.b16 %v766
    %v844 = vunpack.c.h.b16 %v766
    %v845 = vunpack.c.l.b16 %v767
    %v846 = vunpack.c.h.b16 %v767
    %v847 = vunpack.c.l.b16 %v768
    %v848 = vunpack.c.h.b16 %v768
    %v849 = vunpack.c.l.b16 %v769
    %v850 = vunpack.c.h.b16 %v769
    %v851 = vunpack.c.l.b16 %v770
    %v852 = vunpack.c.h.b16 %v770
    %v853 = vunpack.c.l.b16 %v771
    %v854 = vunpack.c.h.b16 %v771
    %v855 = vunpack.c.l.b16 %v772
    %v856 = vunpack.c.h.b16 %v772
    %v857 = vunpack.c.l.b16 %v773
    %v858 = vunpack.c.h.b16 %v773
    %v859 = vunpack.c.l.b16 %v774
    %v860 = vunpack.c.h.b16 %v774
    %v861 = vunpack.c.l.b16 %v775
    %v862 = vunpack.c.h.b16 %v775
    %v863 = vunpack.c.l.b16 %v776
    %v864 = vunpack.c.h.b16 %v776
    %v865 = vunpack.c.l.b16 %v777
    %v866 = vunpack.c.h.b16 %v777
    %v867 = vunpack.c.l.b16 %v778
    %v868 = vunpack.c.h.b16 %v778
    %v869 = vunpack.c.l.b16 %v779
    %v870 = vunpack.c.h.b16 %v779
    %v871 = vunpack.c.l.b16 %v780
    %v872 = vunpack.c.h.b16 %v780
    %v873 = vunpack.c.l.b16 %v781
    %v874 = vunpack.c.h.b16 %v781
    %v875 = vunpack.c.l.b16 %v782
    %v876 = vunpack.c.h.b16 %v782
    %v877 = vunpack.c.l.b16 %v783
    %v878 = vunpack.c.h.b16 %v783
    %v879 = vunpack.c.l.b16 %v784
    %v880 = vunpack.c.h.b16 %v784
    %v881 = vunpack.c.l.b16 %v785
    %v882 = vunpack.c.h.b16 %v785
    %v883 = vunpack.c.l.b16 %v786
    %v884 = vunpack.c.h.b16 %v786
    %v885 = vunpack.c.l.b16 %v787
    %v886 = vunpack.c.h.b16 %v787
    %v887 = vunpack.c.l.b16 %v788
    %v888 = vunpack.c.h.b16 %v788
    %v889 = vunpack.c.l.b16 %v789
    %v890 = vunpack.c.h.b16 %v789
    %v891 = vunpack.c.l.b16 %v790
    %v892 = vunpack.c.h.b16 %v790
    %v893 = vunpack.c.l.b16 %v791
    %v894 = vunpack.c.h.b16 %v791
    %v895 = vunpack.c.l.b16 %v792
    %v896 = vunpack.c.h.b16 %v792
    %v897 = vunpack.c.l.b16 %v793
    %v898 = vunpack.c.h.b16 %v793
    %v899 = vunpack.c.l.b16 %v794
    %v900 = vunpack.c.h.b16 %v794
    %v901 = vunpack.c.l.b16 %v795
    %v902 = vunpack.c.h.b16 %v795
    %v903 = vpack.c.b16 %v841, %v839
    %v904 = vpack.c.b16 %v842, %v840
    %v905 = vpack.c.b16 %v845, %v843
    %v906 = vpack.c.b16 %v846, %v844
    %v907 = vpack.c.b16 %v849, %v847
    %v908 = vpack.c.b16 %v850, %v848
    %v909 = vpack.c.b16 %v853, %v851
    %v910 = vpack.c.b16 %v854, %v852
    %v911 = vpack.c.b16 %v857, %v855
    %v912 = vpack.c.b16 %v858, %v856
    %v913 = vpack.c.b16 %v861, %v859
    %v914 = vpack.c.b16 %v862, %v860
    %v915 = vpack.c.b16 %v865, %v863
    %v916 = vpack.c.b16 %v866, %v864
    %v917 = vpack.c.b16 %v869, %v867
    %v918 = vpack.c.b16 %v870, %v868
    %v919 = vpack.c.b16 %v873, %v871
    %v920 = vpack.c.b16 %v874, %v872
    %v921 = vpack.c.b16 %v877, %v875
    %v922 = vpack.c.b16 %v878, %v876
    %v923 = vpack.c.b16 %v881, %v879
    %v924 = vpack.c.b16 %v882, %v880
    %v925 = vpack.c.b16 %v885, %v883
    %v926 = vpack.c.b16 %v886, %v884
    %v927 = vpack.c.b16 %v889, %v887
    %v928 = vpack.c.b16 %v890, %v888
    %v929 = vpack.c.b16 %v893, %v891
    %v930 = vpack.c.b16 %v894, %v892
    %v931 = vpack.c.b16 %v897, %v895
    %v932 = vpack.c.b16 %v898, %v896
    %v933 = vpack.c.b16 %v901, %v899
    %v934 = vpack.c.b16 %v902, %v900
    %967 = vmatprep.subr.bf16.mxu0 %v904
    %968 = vmatpush1.bf16.msra.mxu0 %v903
    %969 = vmatprep.subr.bf16.mxu0 %v906
    %970 = vmatpush1.bf16.msra.mxu0 %v905
    %971 = vmatprep.subr.bf16.mxu0 %v908
    %972 = vmatpush1.bf16.msra.mxu0 %v907
    %973 = vmatprep.subr.bf16.mxu0 %v910
    %974 = vmatpush1.bf16.msra.mxu0 %v909
    %975 = vmatprep.subr.bf16.mxu0 %v912
    %976 = vmatpush1.bf16.msra.mxu0 %v911
    %977 = vmatprep.subr.bf16.mxu0 %v914
    %978 = vmatpush1.bf16.msra.mxu0 %v913
    %979 = vmatprep.subr.bf16.mxu0 %v916
    %980 = vmatpush1.bf16.msra.mxu0 %v915
    %981 = vmatprep.subr.bf16.mxu0 %v918
    %982 = vmatpush1.bf16.msra.mxu0 %v917
    %983 = vmatprep.subr.bf16.mxu0 %v920
    %984 = vmatpush1.bf16.msra.mxu0 %v919
    %985 = vmatprep.subr.bf16.mxu0 %v922
    %986 = vmatpush1.bf16.msra.mxu0 %v921
    %987 = vmatprep.subr.bf16.mxu0 %v924
    %988 = vmatpush1.bf16.msra.mxu0 %v923
    %989 = vmatprep.subr.bf16.mxu0 %v926
    %990 = vmatpush1.bf16.msra.mxu0 %v925
    %991 = vmatprep.subr.bf16.mxu0 %v928
    %992 = vmatpush1.bf16.msra.mxu0 %v927
    %993 = vmatprep.subr.bf16.mxu0 %v930
    %994 = vmatpush1.bf16.msra.mxu0 %v929
    %995 = vmatprep.subr.bf16.mxu0 %v932
    %996 = vmatpush1.bf16.msra.mxu0 %v931
    %997 = vmatprep.subr.bf16.mxu0 %v934
    %998 = vmatpush1.bf16.msra.mxu0 %v933
    %999 = vmatprep.mubr.bf16.mxu0 %v757
    %1000 = vmatmul.mubr.bf16.gmra.mrb[0].mxu0 %v756
    %v1001 = vpop.f32.mrb[0].mxu0
    %v1002 = vadd.f32 %v800, %v1001
    %v1003 = vpop.f32.mrb[0].mxu0
    %v1004 = vadd.f32 %v804, %v1003
    %v1005 = vpop.f32.mrb[0].mxu0
    %v1006 = vadd.f32 %v800, %v1005
    %v1007 = vpop.f32.mrb[0].mxu0
    %v1008 = vadd.f32 %v804, %v1007
    %1009 = vmatprep.mubr.bf16.mxu0 %v759
    %1010 = vmatmul.mubr.bf16.gmra.mrb[0].mxu0 %v758
    %v1011 = vpop.f32.mrb[0].mxu0
    %v1012 = vadd.f32 %v800, %v1011
    %v1013 = vpop.f32.mrb[0].mxu0
    %v1014 = vadd.f32 %v804, %v1013
    %v1015 = vpop.f32.mrb[0].mxu0
    %v1016 = vadd.f32 %v800, %v1015
    %v1017 = vpop.f32.mrb[0].mxu0
    %v1018 = vadd.f32 %v804, %v1017
    %1019 = vmatprep.mubr.bf16.mxu0 %v761
    %1020 = vmatmul.mubr.bf16.gmra.mrb[0].mxu0 %v760
    %v1021 = vpop.f32.mrb[0].mxu0
    %v1022 = vadd.f32 %v800, %v1021
    %v1023 = vpop.f32.mrb[0].mxu0
    %v1024 = vadd.f32 %v804, %v1023
    %v1025 = vpop.f32.mrb[0].mxu0
    %v1026 = vadd.f32 %v800, %v1025
    %v1027 = vpop.f32.mrb[0].mxu0
    %v1028 = vadd.f32 %v804, %v1027
    %1029 = vmatprep.mubr.bf16.mxu0 %v763
    %1030 = vmatmul.mubr.bf16.gmra.mrb[0].mxu0 %v762
    %v1031 = vpop.f32.mrb[0].mxu0
    %v1032 = vadd.f32 %v800, %v1031
    %v1033 = vpop.f32.mrb[0].mxu0
    %v1034 = vadd.f32 %v804, %v1033
    %v1035 = vpop.f32.mrb[0].mxu0
    %v1036 = vadd.f32 %v800, %v1035
    %v1037 = vpop.f32.mrb[0].mxu0
    %v1038 = vadd.f32 %v804, %v1037
    %1039 = vdwg.mxu0
    %v1040 = vmax.f32 %v1002, 0.0
    %v1041 = vmax.f32 %v1004, 0.0
    %v1042 = vmax.f32 %v1006, 0.0
    %v1043 = vmax.f32 %v1008, 0.0
    %v1044 = vmax.f32 %v1012, 0.0
    %v1045 = vmax.f32 %v1014, 0.0
    %v1046 = vmax.f32 %v1016, 0.0
    %v1047 = vmax.f32 %v1018, 0.0
    %v1048 = vmax.f32 %v1022, 0.0
    %v1049 = vmax.f32 %v1024, 0.0
    %v1050 = vmax.f32 %v1026, 0.0
    %v1051 = vmax.f32 %v1028, 0.0
    %v1052 = vmax.f32 %v1032, 0.0
    %v1053 = vmax.f32 %v1034, 0.0
    %v1054 = vmax.f32 %v1036, 0.0
    %v1055 = vmax.f32 %v1038, 0.0
    %v1056 = vpack.c.bf16 %v1042, %v1040
    %v1057 = vpack.c.bf16 %v1043, %v1041
    %v1058 = vpack.c.bf16 %v1046, %v1044
    %v1059 = vpack.c.bf16 %v1047, %v1045
    %v1060 = vpack.c.bf16 %v1050, %v1048
    %v1061 = vpack.c.bf16 %v1051, %v1049
    %v1062 = vpack.c.bf16 %v1054, %v1052
    %v1063 = vpack.c.bf16 %v1055, %v1053
    %v1064 = vld [vmem:[#allocation7] sm:$0xf]
    %v1065 = vld [vmem:[#allocation7 + $0x4] sm:$0xf]
    %v1066 = vld [vmem:[#allocation7 + $0x8] sm:$0xf]
    %v1067 = vld [vmem:[#allocation7 + $0xc] sm:$0xf]
    %v1068 = vld [vmem:[#allocation7 + $0x10] sm:$0xf]
    %v1069 = vld [vmem:[#allocation7 + $0x14] sm:$0xf]
    %v1070 = vld [vmem:[#allocation7 + $0x18] sm:$0xf]
    %v1071 = vld [vmem:[#allocation7 + $0x1c] sm:$0xf]
    %v1072 = vld [vmem:[#allocation7 + $0x20] sm:$0xf]
    %v1073 = vld [vmem:[#allocation7 + $0x24] sm:$0xf]
    %v1074 = vld [vmem:[#allocation7 + $0x28] sm:$0xf]
    %v1075 = vld [vmem:[#allocation7 + $0x2c] sm:$0xf]
    %v1076 = vld [vmem:[#allocation7 + $0x30] sm:$0xf]
    %v1077 = vld [vmem:[#allocation7 + $0x34] sm:$0xf]
    %v1078 = vld [vmem:[#allocation7 + $0x38] sm:$0xf]
    %v1079 = vld [vmem:[#allocation7 + $0x3c] sm:$0xf]
    %v1080 = vld [vmem:[#allocation7 + $0x40] sm:$0xf]
    %v1081 = vld [vmem:[#allocation7 + $0x44] sm:$0xf]
    %v1082 = vld [vmem:[#allocation7 + $0x48] sm:$0xf]
    %v1083 = vld [vmem:[#allocation7 + $0x4c] sm:$0xf]
    %v1084 = vld [vmem:[#allocation7 + $0x50] sm:$0xf]
    %v1085 = vld [vmem:[#allocation7 + $0x54] sm:$0xf]
    %v1086 = vld [vmem:[#allocation7 + $0x58] sm:$0xf]
    %v1087 = vld [vmem:[#allocation7 + $0x5c] sm:$0xf]
    %v1088 = vld [vmem:[#allocation7 + $0x60] sm:$0xf]
    %v1089 = vld [vmem:[#allocation7 + $0x64] sm:$0xf]
    %v1090 = vld [vmem:[#allocation7 + $0x68] sm:$0xf]
    %v1091 = vld [vmem:[#allocation7 + $0x6c] sm:$0xf]
    %v1092 = vld [vmem:[#allocation7 + $0x70] sm:$0xf]
    %v1093 = vld [vmem:[#allocation7 + $0x74] sm:$0xf]
    %v1094 = vld [vmem:[#allocation7 + $0x78] sm:$0xf]
    %v1095 = vld [vmem:[#allocation7 + $0x7c] sm:$0xf]
    %v1128 = vunpack.c.l.b16 %v1064
    %v1129 = vunpack.c.l.b16 %v1065
    %v1130 = vunpack.c.l.b16 %v1066
    %v1131 = vunpack.c.l.b16 %v1067
    %v1132 = vunpack.c.l.b16 %v1068
    %v1133 = vunpack.c.l.b16 %v1069
    %v1134 = vunpack.c.l.b16 %v1070
    %v1135 = vunpack.c.l.b16 %v1071
    %v1136 = vunpack.c.l.b16 %v1072
    %v1137 = vunpack.c.l.b16 %v1073
    %v1138 = vunpack.c.l.b16 %v1074
    %v1139 = vunpack.c.l.b16 %v1075
    %v1140 = vunpack.c.l.b16 %v1076
    %v1141 = vunpack.c.l.b16 %v1077
    %v1142 = vunpack.c.l.b16 %v1078
    %v1143 = vunpack.c.l.b16 %v1079
    %v1144 = vunpack.c.l.b16 %v1080
    %v1145 = vunpack.c.l.b16 %v1081
    %v1146 = vunpack.c.l.b16 %v1082
    %v1147 = vunpack.c.l.b16 %v1083
    %v1148 = vunpack.c.l.b16 %v1084
    %v1149 = vunpack.c.l.b16 %v1085
    %v1150 = vunpack.c.l.b16 %v1086
    %v1151 = vunpack.c.l.b16 %v1087
    %v1152 = vunpack.c.l.b16 %v1088
    %v1153 = vunpack.c.l.b16 %v1089
    %v1154 = vunpack.c.l.b16 %v1090
    %v1155 = vunpack.c.l.b16 %v1091
    %v1156 = vunpack.c.l.b16 %v1092
    %v1157 = vunpack.c.l.b16 %v1093
    %v1158 = vunpack.c.l.b16 %v1094
    %v1159 = vunpack.c.l.b16 %v1095
    %v1160 = vpack.c.b16 %v1129, %v1128
    %v1161 = vpack.c.b16 %v1131, %v1130
    %v1162 = vpack.c.b16 %v1133, %v1132
    %v1163 = vpack.c.b16 %v1135, %v1134
    %v1164 = vpack.c.b16 %v1137, %v1136
    %v1165 = vpack.c.b16 %v1139, %v1138
    %v1166 = vpack.c.b16 %v1141, %v1140
    %v1167 = vpack.c.b16 %v1143, %v1142
    %v1168 = vpack.c.b16 %v1145, %v1144
    %v1169 = vpack.c.b16 %v1147, %v1146
    %v1170 = vpack.c.b16 %v1149, %v1148
    %v1171 = vpack.c.b16 %v1151, %v1150
    %v1172 = vpack.c.b16 %v1153, %v1152
    %v1173 = vpack.c.b16 %v1155, %v1154
    %v1174 = vpack.c.b16 %v1157, %v1156
    %v1175 = vpack.c.b16 %v1159, %v1158
    %1192 = vmatprep.subr.bf16.mxu0 0
    %1193 = vmatpush1.bf16.msra.mxu0 %v1160
    %1194 = vmatprep.subr.bf16.mxu0 0
    %1195 = vmatpush1.bf16.msra.mxu0 %v1161
    %1196 = vmatprep.subr.bf16.mxu0 0
    %1197 = vmatpush1.bf16.msra.mxu0 %v1162
    %1198 = vmatprep.subr.bf16.mxu0 0
    %1199 = vmatpush1.bf16.msra.mxu0 %v1163
    %1200 = vmatprep.subr.bf16.mxu0 0
    %1201 = vmatpush1.bf16.msra.mxu0 %v1164
    %1202 = vmatprep.subr.bf16.mxu0 0
    %1203 = vmatpush1.bf16.msra.mxu0 %v1165
    %1204 = vmatprep.subr.bf16.mxu0 0
    %1205 = vmatpush1.bf16.msra.mxu0 %v1166
    %1206 = vmatprep.subr.bf16.mxu0 0
    %1207 = vmatpush1.bf16.msra.mxu0 %v1167
    %1208 = vmatprep.subr.bf16.mxu0 0
    %1209 = vmatpush1.bf16.msra.mxu0 %v1168
    %1210 = vmatprep.subr.bf16.mxu0 0
    %1211 = vmatpush1.bf16.msra.mxu0 %v1169
    %1212 = vmatprep.subr.bf16.mxu0 0
    %1213 = vmatpush1.bf16.msra.mxu0 %v1170
    %1214 = vmatprep.subr.bf16.mxu0 0
    %1215 = vmatpush1.bf16.msra.mxu0 %v1171
    %1216 = vmatprep.subr.bf16.mxu0 0
    %1217 = vmatpush1.bf16.msra.mxu0 %v1172
    %1218 = vmatprep.subr.bf16.mxu0 0
    %1219 = vmatpush1.bf16.msra.mxu0 %v1173
    %1220 = vmatprep.subr.bf16.mxu0 0
    %1221 = vmatpush1.bf16.msra.mxu0 %v1174
    %1222 = vmatprep.subr.bf16.mxu0 0
    %1223 = vmatpush1.bf16.msra.mxu0 %v1175
    %1224 = vmatprep.mubr.bf16.mxu0 %v1057
    %1225 = vmatmul.mubr.bf16.gmra.mrb[0].mxu0 %v1056
    %v1226 = vpop.f32.mrb[0].mxu0
    %v1227 = vadd.f32 %v116, %v1226
    %v1228 = vpop.f32.mrb[0].mxu0
    %v1229 = vpop.f32.mrb[0].mxu0
    %v1230 = vadd.f32 %v116, %v1229
    %v1231 = vpop.f32.mrb[0].mxu0
    %1232 = vmatprep.mubr.bf16.mxu0 %v1059
    %1233 = vmatmul.mubr.bf16.gmra.mrb[0].mxu0 %v1058
    %v1234 = vpop.f32.mrb[0].mxu0
    %v1235 = vadd.f32 %v116, %v1234
    %v1236 = vpop.f32.mrb[0].mxu0
    %v1237 = vpop.f32.mrb[0].mxu0
    %v1238 = vadd.f32 %v116, %v1237
    %v1239 = vpop.f32.mrb[0].mxu0
    %1240 = vmatprep.mubr.bf16.mxu0 %v1061
    %1241 = vmatmul.mubr.bf16.gmra.mrb[0].mxu0 %v1060
    %v1242 = vpop.f32.mrb[0].mxu0
    %v1243 = vadd.f32 %v116, %v1242
    %v1244 = vpop.f32.mrb[0].mxu0
    %v1245 = vpop.f32.mrb[0].mxu0
    %v1246 = vadd.f32 %v116, %v1245
    %v1247 = vpop.f32.mrb[0].mxu0
    %1248 = vmatprep.mubr.bf16.mxu0 %v1063
    %1249 = vmatmul.mubr.bf16.gmra.mrb[0].mxu0 %v1062
    %v1250 = vpop.f32.mrb[0].mxu0
    %v1251 = vadd.f32 %v116, %v1250
    %v1252 = vpop.f32.mrb[0].mxu0
    %v1253 = vpop.f32.mrb[0].mxu0
    %v1254 = vadd.f32 %v116, %v1253
    %v1255 = vpop.f32.mrb[0].mxu0
    %1256 = vdwg.mxu0
    %1257 = vst [vmem:[%s8] sm:$0xff] %v1227
    %1258 = vst [vmem:[%s8 + $0x8] sm:$0xff] %v1230
    %1259 = vst [vmem:[%s8 + $0x10] sm:$0xff] %v1235
    %1260 = vst [vmem:[%s8 + $0x18] sm:$0xff] %v1238
    %1261 = vst [vmem:[%s8 + $0x20] sm:$0xff] %v1243
    %1262 = vst [vmem:[%s8 + $0x28] sm:$0xff] %v1246
    %1263 = vst [vmem:[%s8 + $0x30] sm:$0xff] %v1251
    %1264 = vst [vmem:[%s8 + $0x38] sm:$0xff] %v1254
    // Predicated region
    $region50: #{_critic_call.1} parent=1 // pred_check
      _
    $region51: #{_critic_call.1} parent=1 // pred_check_branch
      %1266 = sbr.rel (0) target = $region53
    $region52: #{_critic_call.1} parent=1 // pred_region
      _
    $region53: #{_critic_call.1} parent=1 // pred_fallthru
      _
    // Predicated region
    $region54: #{_critic_call.1} parent=1 // pred_check
      _
    $region55: #{_critic_call.1} parent=1 // pred_check_branch
      %1268 = sbr.rel (0) target = $region57
    $region56: #{_critic_call.1} parent=1 // pred_region
      _
    $region57: #{_critic_call.1} parent=1 // pred_fallthru
      _
    %1269 = vsyncpa [#allocation3], 1
    %1270 = vsyncpa [#allocation5], 1
    %1271 = vsyncpa [#allocation8], 1

</llo_original>
